<compile_context>
chip_gen: v7x
topology: tpu7x:2x2x1
jax: 0.10.0
libtpu: 0.0.40
codegen_flags: <defaults>
</compile_context>

<pallas_src>
import functools
import math

import jax
import jax.numpy as jnp
from jax.experimental import pallas as pl
from jax.experimental.pallas import tpu as pltpu


MIN_VALUE = -1.0 / 256.0
MAX_VALUE = 1.0 + 1.0 / 256.0

_LANES = 128
_SUBLANES = 8


def _choose_tile_s(s0: int) -> int:
    """Pick sublane tile size: ~1024 (512 KiB f32 block) or round small S up to 8."""
    target = 1024
    if s0 >= target:
        return target
    return max(_SUBLANES, ((s0 + _SUBLANES - 1) // _SUBLANES) * _SUBLANES)


def _logit_kernel(x_ref, z_ref, jacp_ref, *, min_value, max_value, tile_s):
    # x_ref/z_ref: (TILE_S, 128) blocks; jacp_ref: (8, 128) resident accumulator.
    inv_scale = 1.0 / (max_value - min_value)          # Python compile-time constant

    x = x_ref[...].astype(jnp.float32)                 # (TILE_S, 128)
    y = (x - min_value) * inv_scale
    log_y = jnp.log(y)
    log_1my = jnp.log(1.0 - y)

    z_ref[...] = (log_y - log_1my).astype(z_ref.dtype)

    # log|dzdy| = log|−1/((y−1)y)| = −log(y) − log(1−y)  for y in (0, 1):
    # reuses the two logs already computed for z (no reciprocal, no extra log).
    jac_elem = -(log_y + log_1my)                      # (TILE_S, 128)

    # Cross-vreg reduction only (pure VPU adds): (TILE_S,128)->(TILE_S/8,8,128)->(8,128)
    partial = jac_elem.reshape(tile_s // _SUBLANES, _SUBLANES, _LANES).sum(axis=0)

    @pl.when(pl.program_id(1) == 0)
    def _():
        jacp_ref[...] = jnp.zeros_like(jacp_ref)

    jacp_ref[...] += partial


def logit_forward(x, min_value=MIN_VALUE, max_value=MAX_VALUE):
    """x: (B, C, H, W) float array.  Returns (z with same shape, jac of shape (B,))."""
    b = x.shape[0]
    orig_shape = x.shape
    f = math.prod(x.shape[1:])
    scale = max_value - min_value

    # Lane-dense layout: (B, F) -> (B, S, 128), padded so S is a multiple of TILE_S.
    s0 = pl.cdiv(f, _LANES)
    tile_s = _choose_tile_s(s0)
    s = pl.cdiv(s0, tile_s) * tile_s
    f_pad = s * _LANES
    pad_count = f_pad - f

    x2d = x.reshape(b, f)
    if pad_count:
        # Pad value maps to y == 0.5 -> known contribution 2*ln(2) per pad element,
        # subtracted back out in the finalize constant below.
        pad_val = min_value + 0.5 * scale
        x2d = jnp.pad(x2d, ((0, 0), (0, pad_count)), constant_values=pad_val)
    x3d = x2d.reshape(b, s, _LANES)

    kernel = functools.partial(
        _logit_kernel, min_value=min_value, max_value=max_value, tile_s=tile_s
    )

    z3d, jacp = pl.pallas_call(
        kernel,
        out_shape=(
            jax.ShapeDtypeStruct((b, s, _LANES), x.dtype),
            jax.ShapeDtypeStruct((b, _SUBLANES, _LANES), jnp.float32),
        ),
        grid=(b, s // tile_s),
        in_specs=[
            pl.BlockSpec((None, tile_s, _LANES), lambda bi, si: (bi, si, 0)),
        ],
        out_specs=(
            pl.BlockSpec((None, tile_s, _LANES), lambda bi, si: (bi, si, 0)),
            # Accumulator: same block for every feature step -> stays resident in VMEM.
            pl.BlockSpec((None, _SUBLANES, _LANES), lambda bi, si: (bi, 0, 0)),
        ),
        compiler_params=pltpu.CompilerParams(
            dimension_semantics=("parallel", "arbitrary"),
            vmem_limit_bytes=32 * 1024 * 1024,
        ),
    )(x3d)

    z = z3d.reshape(b, f_pad)[:, :f].reshape(orig_shape)

    # Fold the constant per-row terms once (Python floats):
    #   + F * log|1/scale|          (the dydx term for every real element)
    #   - pad_count * 2*ln(2)       (remove padded y=0.5 contributions)
    const = f * math.log(abs(1.0 / scale)) - pad_count * (2.0 * math.log(2.0))
    jac = jacp.reshape(b, -1).sum(axis=-1) + const
    return z, jac


def logit_forward_ref(x, min_value=MIN_VALUE, max_value=MAX_VALUE):
    """Pure-JAX reference mirroring the PyTorch semantics."""
    b = x.shape[0]
    scale = max_value - min_value
    y = (x - min_value) / scale
    z = jnp.log(y) - jnp.log(1.0 - y)
    dzdy = -1.0 / ((y - 1.0) * y)
    dydx = 1.0 / scale
    jac = jnp.log(jnp.abs(dzdy)) + jnp.log(jnp.abs(jnp.float32(dydx)))
    return z, jac.reshape(b, -1).sum(axis=1)


if __name__ == "__main__":
    key = jax.random.PRNGKey(0)
    B, C, H, W = 2, 4, 16, 16
    # Inputs in [0, 1] like image data (the module's intended domain).
    x = jax.random.uniform(key, (B, C, H, W), dtype=jnp.float32)

    z, jac = logit_forward(x)
    jax.block_until_ready((z, jac))

    z_ref, jac_ref = logit_forward_ref(x)
    assert z.shape == (B, C, H, W) and jac.shape == (B,)
    assert jnp.allclose(z, z_ref, atol=1e-4, rtol=1e-4)
    assert jnp.allclose(jac, jac_ref, atol=1e-2, rtol=1e-4)

    print("KERNEL_OK")
</pallas_src>

<mosaic_0001>
module attributes {stable_mosaic.version = 11 : i64} {
  func.func @_logit_kernel(%arg0: i32, %arg1: i32, %arg2: memref<1x8x128xf32, #tpu.memory_space<vmem>>, %arg3: memref<1x8x128xf32, #tpu.memory_space<vmem>>, %arg4: memref<1x8x128xf32, #tpu.memory_space<vmem>>) attributes {dimension_semantics = [#tpu.dimension_semantics<parallel>, #tpu.dimension_semantics<arbitrary>], iteration_bounds = array<i64: 2, 1>, scalar_prefetch = 0 : i64, scratch_operands = 0 : i64, tpu.core_type = #tpu.core_type<tc>, window_params = [{transform_indices = @transform_0, window_bounds = array<i64: 1, 8, 128>}, {transform_indices = @transform_1, window_bounds = array<i64: 1, 8, 128>}, {transform_indices = @transform_2, window_bounds = array<i64: 1, 8, 128>}]} {
    %c0 = arith.constant 0 : index
    %c0_0 = arith.constant 0 : index
    %c0_1 = arith.constant 0 : index
    %0 = vector.load %arg2[%c0, %c0_0, %c0_1] : memref<1x8x128xf32, #tpu.memory_space<vmem>>, vector<1x8x128xf32>
    %1 = vector.shape_cast %0 : vector<1x8x128xf32> to vector<8x128xf32>
    %cst = arith.constant -3.906250e-03 : f32
    %2 = vector.broadcast %cst : f32 to vector<8x128xf32>
    %3 = arith.subf %1, %2 : vector<8x128xf32>
    %cst_2 = arith.constant 0.992248058 : f32
    %4 = vector.broadcast %cst_2 : f32 to vector<8x128xf32>
    %5 = arith.mulf %3, %4 : vector<8x128xf32>
    %6 = math.log %5 : vector<8x128xf32>
    %cst_3 = arith.constant 1.000000e+00 : f32
    %7 = vector.broadcast %cst_3 : f32 to vector<8x128xf32>
    %8 = arith.subf %7, %5 : vector<8x128xf32>
    %9 = math.log %8 : vector<8x128xf32>
    %10 = arith.subf %6, %9 : vector<8x128xf32>
    %c0_4 = arith.constant 0 : index
    %c0_5 = arith.constant 0 : index
    %c0_6 = arith.constant 0 : index
    %11 = vector.load %arg3[%c0_4, %c0_5, %c0_6] : memref<1x8x128xf32, #tpu.memory_space<vmem>>, vector<1x8x128xf32>
    %12 = vector.shape_cast %11 : vector<1x8x128xf32> to vector<8x128xf32>
    %13 = vector.shape_cast %10 : vector<8x128xf32> to vector<1x8x128xf32>
    tpu.vector_store %arg3[%c0_4, %c0_5, %c0_6], %13 {strides = array<i32>} : memref<1x8x128xf32, #tpu.memory_space<vmem>>, vector<1x8x128xf32>,
    %14 = arith.addf %6, %9 : vector<8x128xf32>
    %cst_7 = arith.constant 0.000000e+00 : f32
    %15 = vector.broadcast %cst_7 : f32 to vector<8x128xf32>
    %16 = arith.subf %15, %14 : vector<8x128xf32>
    %17 = vector.shape_cast %16 : vector<8x128xf32> to vector<1x8x128xf32>
    %cst_8 = arith.constant dense<0.000000e+00> : vector<8x128xf32>
    %18 = vector.multi_reduction <add>, %17, %cst_8 [0] : vector<1x8x128xf32> to vector<8x128xf32>
    %c0_i32 = arith.constant 0 : i32
    %19 = arith.cmpi eq, %arg1, %c0_i32 : i32
    %20 = arith.extui %19 : i1 to i32
    %c0_i32_9 = arith.constant 0 : i32
    %21 = arith.cmpi ne, %20, %c0_i32_9 : i32
    scf.if %21 {
      %cst_16 = arith.constant 0.000000e+00 : f32
      %28 = vector.broadcast %cst_16 : f32 to vector<8x128xf32>
      %c0_17 = arith.constant 0 : index
      %c0_18 = arith.constant 0 : index
      %c0_19 = arith.constant 0 : index
      %29 = vector.load %arg4[%c0_17, %c0_18, %c0_19] : memref<1x8x128xf32, #tpu.memory_space<vmem>>, vector<1x8x128xf32>
      %30 = vector.shape_cast %29 : vector<1x8x128xf32> to vector<8x128xf32>
      %31 = vector.shape_cast %28 : vector<8x128xf32> to vector<1x8x128xf32>
      tpu.vector_store %arg4[%c0_17, %c0_18, %c0_19], %31 {strides = array<i32>} : memref<1x8x128xf32, #tpu.memory_space<vmem>>, vector<1x8x128xf32>,
    } else {
    }
    %c0_10 = arith.constant 0 : index
    %c0_11 = arith.constant 0 : index
    %c0_12 = arith.constant 0 : index
    %22 = vector.load %arg4[%c0_10, %c0_11, %c0_12] : memref<1x8x128xf32, #tpu.memory_space<vmem>>, vector<1x8x128xf32>
    %23 = vector.shape_cast %22 : vector<1x8x128xf32> to vector<8x128xf32>
    %24 = arith.addf %23, %18 : vector<8x128xf32>
    %c0_13 = arith.constant 0 : index
    %c0_14 = arith.constant 0 : index
    %c0_15 = arith.constant 0 : index
    %25 = vector.load %arg4[%c0_13, %c0_14, %c0_15] : memref<1x8x128xf32, #tpu.memory_space<vmem>>, vector<1x8x128xf32>
    %26 = vector.shape_cast %25 : vector<1x8x128xf32> to vector<8x128xf32>
    %27 = vector.shape_cast %24 : vector<8x128xf32> to vector<1x8x128xf32>
    tpu.vector_store %arg4[%c0_13, %c0_14, %c0_15], %27 {strides = array<i32>} : memref<1x8x128xf32, #tpu.memory_space<vmem>>, vector<1x8x128xf32>,
    return
  }
  func.func @transform_0(%arg0: i32, %arg1: i32) -> (i32, i32, i32) {
    %c0_i32 = arith.constant 0 : i32
    %c0_i32_0 = arith.constant 0 : i32
    return %arg0, %arg1, %c0_i32 : i32, i32, i32
  }
  func.func @transform_1(%arg0: i32, %arg1: i32) -> (i32, i32, i32) {
    %c0_i32 = arith.constant 0 : i32
    %c0_i32_0 = arith.constant 0 : i32
    return %arg0, %arg1, %c0_i32 : i32, i32, i32
  }
  func.func @transform_2(%arg0: i32, %arg1: i32) -> (i32, i32, i32) {
    %c0_i32 = arith.constant 0 : i32
    %c0_i32_0 = arith.constant 0 : i32
    %c0_i32_1 = arith.constant 0 : i32
    return %arg0, %c0_i32, %c0_i32_0 : i32, i32, i32
  }
}

</mosaic_0001>

<llo_original>
// kernel: tpu_custom_call.1
$region0: #{tpu_custom_call.1}
  #allocation0 [shape = 'u32[]', space=smem, size = 0x4, offset = 0x4, fixed_abs, tag = 'smem constant byte address 0x4 - core index']
  #allocation1 [shape = 'u32[144,128]{1,0:T(1,128)}', space=vmem, size = 0x12000, scoped, tag = 'internal scratch']
  %s0 = inlined_call_operand.hbm [shape: f32[2,8,128], index: 0, kind: input, shape index: {}]
  %s1 = inlined_call_operand.hbm [shape: f32[2,8,128], index: 1, kind: output, shape index: {0}]
  %s2 = inlined_call_operand.hbm [shape: f32[2,8,128], index: 2, kind: output, shape index: {1}]
  %3 = xla_tuple %s1, %s2
  %s4 = sld [smem:[#allocation0]]
  $region53: #{tpu_custom_call.1} parent=0
    _
  %s6 = ssub.s32 1, %s4
  %s7 = scalar_select 0, %s6, %s4
  $region1: #{tpu_custom_call.1} parent=0
    #allocation2 [shape = 'u8[8192]{0}', space=vmem, size = 0x2000, scoped, tag = 'input window, operand 0']
    #allocation3 [shape = 's32[2]{0}', space=sflag, size = 0x8, scoped, tag = 'scoped memory for tpu_custom_call.1']
    #allocation4 [shape = 's32[2]{0}', space=sflag, size = 0x8, scoped, tag = 'scoped memory for tpu_custom_call.1']
    #allocation5 [shape = 'u8[8192]{0}', space=vmem, size = 0x2000, scoped, tag = 'output window, operand 0']
    #allocation6 [shape = 'u8[8192]{0}', space=vmem, size = 0x2000, scoped, tag = 'output window, operand 1']
    #allocation7 [shape = 's32[2]{0}', space=sflag, size = 0x8, scoped, tag = 'scoped memory for tpu_custom_call.1']
    %8 = vsyncpa [#allocation3], 0
    %s9 = scalar_lea.sflag [#allocation3], 1
    %10 = vsyncpa %s9, 0
    %11 = vsyncpa [#allocation4], 0
    %s12 = scalar_lea.sflag [#allocation4], 1
    %13 = vsyncpa %s12, 0
    %14 = vsyncpa [#allocation7], 0
    %s15 = scalar_lea.sflag [#allocation7], 1
    %16 = vsyncpa %s15, 0
    loop: start=0, step=1, limit=4
    $region2: #{tpu_custom_call.1} parent=1 // loop_pre_header
      _
    $region3: #{tpu_custom_call.1} parent=1 // loop_header
      %s18 = sphi 0, %s22
      %p19 = scmp.ge.s32.totalorder %s18, 4
      %s25 = sphi 0, %s37
      %s26 = sphi 0, %s33
      %s27 = sphi 0, %s25
      %s28 = sphi 0, %s26
      %s29 = sphi 0, %s27
      %s30 = sphi 0, %s28
      %s42 = sphi 0, %s44
      %s45 = sphi 0, %s42
      %s46 = sphi 0, %s45
      %s62 = sphi 0, %s46
      %s70 = sphi 0, %s72
      %s73 = sphi 0, %s70
      %s74 = sphi 0, %s73
      %s90 = sphi 0, %s74
      %s96 = sphi 0, %s98
      %s99 = sphi 0, %s96
      %s100 = sphi 0, %s99
      %s116 = sphi 0, %s100
    $region4: #{tpu_custom_call.1} parent=1 // loop_header_branch
      %21 = sbr.rel (%p19) target = $region8
    $region5: #{tpu_custom_call.1} parent=1 // loop_body
      %s23 = ssub.s32 %s18, 1
      %s24 = ssub.s32 %s18, 2
      %s31 = sadd.s32 1, %s26
      %p32 = scmp.ge.s32.totalorder %s31, 1
      %s33 = scalar_select %p32, 0, %s31
      %s34 = sadd.s32 1, %s25
      %s35 = scalar_select %p32, %s34, %s25
      %p36 = scmp.ge.s32.totalorder %s35, 2
      %s37 = scalar_select %p36, 0, %s35
      %s38 = ssub.s32 %s25, %s37
      %s39 = ssub.s32 %s26, %s33
      %s40 = sor.u32 %s38, %s39
      %p41 = scmp.eq.s32.totalorder %s40, 0
      %s43 = sadd.s32 %s42, 1
      %s44 = scalar_select %p41, %s42, %s43
      %p47 = pneg %p41
      %p48 = scmp.eq.s32.totalorder %s18, 1
      %p49 = por %p47, %p48
      %p50 = scmp.ne.s32.totalorder %s42, %s45
      %p51 = scmp.eq.s32.totalorder %s18, 0
      %p52 = por %p50, %p51
      %p53 = scmp.ne.s32.totalorder %s42, %s45
      %p54 = scmp.eq.s32.totalorder %s23, 1
      %p55 = por %p53, %p54
      %p56 = scmp.ne.s32.totalorder %s45, %s46
      %p57 = scmp.eq.s32.totalorder %s23, 0
      %p58 = por %p56, %p57
      %p59 = scmp.ne.s32.totalorder %s45, %s46
      %p60 = scmp.eq.s32.totalorder %s24, 1
      %p61 = por %p59, %p60
      %p63 = scmp.ne.s32.totalorder %s46, %s62
      %p64 = scmp.eq.s32.totalorder %s24, 0
      %p65 = por %p63, %p64
      %s66 = ssub.s32 %s25, %s37
      %s67 = ssub.s32 %s26, %s33
      %s68 = sor.u32 %s66, %s67
      %p69 = scmp.eq.s32.totalorder %s68, 0
      %s71 = sadd.s32 %s70, 1
      %s72 = scalar_select %p69, %s70, %s71
      %p75 = pneg %p69
      %p76 = scmp.eq.s32.totalorder %s18, 1
      %p77 = por %p75, %p76
      %p78 = scmp.ne.s32.totalorder %s70, %s73
      %p79 = scmp.eq.s32.totalorder %s18, 0
      %p80 = por %p78, %p79
      %p81 = scmp.ne.s32.totalorder %s70, %s73
      %p82 = scmp.eq.s32.totalorder %s23, 1
      %p83 = por %p81, %p82
      %p84 = scmp.ne.s32.totalorder %s73, %s74
      %p85 = scmp.eq.s32.totalorder %s23, 0
      %p86 = por %p84, %p85
      %p87 = scmp.ne.s32.totalorder %s73, %s74
      %p88 = scmp.eq.s32.totalorder %s24, 1
      %p89 = por %p87, %p88
      %p91 = scmp.ne.s32.totalorder %s74, %s90
      %p92 = scmp.eq.s32.totalorder %s24, 0
      %p93 = por %p91, %p92
      %s94 = ssub.s32 %s25, %s37
      %p95 = scmp.eq.s32.totalorder %s94, 0
      %s97 = sadd.s32 %s96, 1
      %s98 = scalar_select %p95, %s96, %s97
      %p101 = pneg %p95
      %p102 = scmp.eq.s32.totalorder %s18, 1
      %p103 = por %p101, %p102
      %p104 = scmp.ne.s32.totalorder %s96, %s99
      %p105 = scmp.eq.s32.totalorder %s18, 0
      %p106 = por %p104, %p105
      %p107 = scmp.ne.s32.totalorder %s96, %s99
      %p108 = scmp.eq.s32.totalorder %s23, 1
      %p109 = por %p107, %p108
      %p110 = scmp.ne.s32.totalorder %s99, %s100
      %p111 = scmp.eq.s32.totalorder %s23, 0
      %p112 = por %p110, %p111
      %p113 = scmp.ne.s32.totalorder %s99, %s100
      %p114 = scmp.eq.s32.totalorder %s24, 1
      %p115 = por %p113, %p114
      %p117 = scmp.ne.s32.totalorder %s100, %s116
      %p118 = scmp.eq.s32.totalorder %s24, 0
      %p119 = por %p117, %p118
      %p120 = scmp.le.s32.totalorder 1, %s18
      %p121 = scmp.lt.s32.totalorder %s18, 3
      %p122 = pnand %p120, %p121
      %p123 = pneg %p122
      // Predicated region
      $region9: #{tpu_custom_call.1} parent=5 // pred_check
        _
      $region10: #{tpu_custom_call.1} parent=5 // pred_check_branch
        %125 = sbr.rel (%p122) target = $region12
      $region11: #{tpu_custom_call.1} parent=5 // pred_region
        %s126 = ssub.s32 %s18, 1
      $region12: #{tpu_custom_call.1} parent=5 // pred_fallthru
        _
      %p127 = scmp.lt.s32.totalorder %s18, 2
      // Predicated region
      $region13: #{tpu_custom_call.1} parent=5 // pred_check
        %p128 = pneg %p127
      $region14: #{tpu_custom_call.1} parent=5 // pred_check_branch
        %130 = sbr.rel (%p128) target = $region16
      $region15: #{tpu_custom_call.1} parent=5 // pred_region
        // Predicated region
        $region17: #{tpu_custom_call.1} parent=15 // pred_check
          %p131 = pneg %p52
        $region18: #{tpu_custom_call.1} parent=15 // pred_check_branch
          %133 = sbr.rel (%p131) target = $region20
        $region19: #{tpu_custom_call.1} parent=15 // pred_region
          %s134 = sand.u32 %s42, 1
          %s135 = scalar_lea.sflag [#allocation3], %s134
          %s136 = sand.u32 %s42, 1
          %s137 = smul.addr %s136, 8
          %s138 = scalar_lea.vmem [#allocation2], %s137
          %s140 = ssub.s32 128, 128
          %141 = vsyncadd %s135, %s140
          %s142 = sadd.s32 %s26, %s25
          %s143 = smul.addr %s142, 128
          %s144 = scalar_lea.hbm %s0, %s143
          %s146 = sshll.u32 %s138, 4
          %s147 = int_to_ptr.vmem [resolvable:$true] %s146
          %149 = dma.hbm_to_vmem [thread:$0]  %s144, 128, %s147, %s135
        $region20: #{tpu_custom_call.1} parent=15 // pred_fallthru
          _
      $region16: #{tpu_custom_call.1} parent=5 // pred_fallthru
        _
      %p150 = scmp.le.s32.totalorder 1, %s18
      %p151 = scmp.lt.s32.totalorder %s18, 3
      %p152 = pnand %p150, %p151
      %p153 = pneg %p152
      // Predicated region
      $region21: #{tpu_custom_call.1} parent=5 // pred_check
        _
      $region22: #{tpu_custom_call.1} parent=5 // pred_check_branch
        %155 = sbr.rel (%p152) target = $region24
      $region23: #{tpu_custom_call.1} parent=5 // pred_region
        %s156 = ssub.s32 %s18, 1
        %s157 = sand.u32 %s45, 1
        %s158 = scalar_lea.sflag [#allocation3], %s157
        %s159 = sand.u32 %s45, 1
        %s160 = smul.addr %s159, 8
        %s161 = scalar_lea.vmem [#allocation2], %s160
        // Predicated region
        $region25: #{tpu_custom_call.1} parent=23 // pred_check
          %p162 = pneg %p58
        $region26: #{tpu_custom_call.1} parent=23 // pred_check_branch
          %164 = sbr.rel (%p162) target = $region28
        $region27: #{tpu_custom_call.1} parent=23 // pred_region
          %165 = dma.done %s158, 128
        $region28: #{tpu_custom_call.1} parent=23 // pred_fallthru
          _
        %s166 = sand.u32 %s45, 1
        %s167 = scalar_lea.sflag [#allocation3], %s166
        %s168 = sand.u32 %s45, 1
        %s169 = smul.addr %s168, 8
        %s170 = scalar_lea.vmem [#allocation2], %s169
        %p171 = pneg %p58
        %p172 = pneg %p55
        %p173 = pneg %p86
        %p174 = pneg %p83
        %s175 = sand.u32 %s73, 1
        %s176 = scalar_lea.sflag [#allocation4], %s175
        %s177 = sand.u32 %s73, 1
        %s178 = smul.addr %s177, 8
        %s179 = scalar_lea.vmem [#allocation5], %s178
        %p180 = pneg %p112
        %p181 = pneg %p109
        %s182 = sand.u32 %s99, 1
        %s183 = scalar_lea.sflag [#allocation7], %s182
        %s184 = sand.u32 %s99, 1
        %s185 = smul.addr %s184, 8
        %s186 = scalar_lea.vmem [#allocation6], %s185
        %v187 = vld [vmem:[%s161] sm:$0xff]
        %v188 = vsub.f32 %v187, -0.00390625
        %v189 = vmul.f32 %v188, 0.99224806
        %v190 = vlog2.pop %v189
        %v191 = vmul.f32 %v190, 0.6931472
        %v192 = vsub.f32 1.0, %v189
        %v193 = vlog2.pop %v192
        %v194 = vmul.f32 %v193, 0.6931472
        %v195 = vsub.f32 %v191, %v194
        %196 = vst [vmem:[%s179] sm:$0xff] %v195
        %v197 = vadd.f32 %v191, %v194
        %v198 = vsub.f32 0.0, %v197
        %v199 = vadd.f32 %v198, 0.0
        %p200 = scmp.eq.s32.totalorder %s28, 0
        // Predicated region
        $region29: #{tpu_custom_call.1} parent=23 // pred_check
          %p201 = pneg %p200
        $region30: #{tpu_custom_call.1} parent=23 // pred_check_branch
          %203 = sbr.rel (%p201) target = $region32
        $region31: #{tpu_custom_call.1} parent=23 // pred_region
          %204 = vst [vmem:[%s186] sm:$0xff] 0.0
        $region32: #{tpu_custom_call.1} parent=23 // pred_fallthru
          _
        %v205 = vld [vmem:[%s186] sm:$0xff]
        %v206 = vadd.f32 %v205, %v199
        %207 = vst [vmem:[%s186] sm:$0xff] %v206
        %s208 = sand.u32 %s73, 1
        %s209 = scalar_lea.sflag [#allocation4], %s208
        %s210 = sand.u32 %s73, 1
        %s211 = smul.addr %s210, 8
        %s212 = scalar_lea.vmem [#allocation5], %s211
        %s213 = sand.u32 %s99, 1
        %s214 = scalar_lea.sflag [#allocation7], %s213
        %s215 = sand.u32 %s99, 1
        %s216 = smul.addr %s215, 8
        %s217 = scalar_lea.vmem [#allocation6], %s216
        // Predicated region
        $region33: #{tpu_custom_call.1} parent=23 // pred_check
          %p218 = pneg %p83
        $region34: #{tpu_custom_call.1} parent=23 // pred_check_branch
          %220 = sbr.rel (%p218) target = $region36
        $region35: #{tpu_custom_call.1} parent=23 // pred_region
          %s222 = ssub.s32 128, 128
          %223 = vsyncadd %s209, %s222
          %s224 = sadd.s32 %s28, %s27
          %s225 = smul.addr %s224, 128
          %s226 = scalar_lea.hbm %s1, %s225
          %s228 = sshll.u32 %s212, 4
          %s229 = int_to_ptr.vmem [resolvable:$true] %s228
          %231 = dma.vmem_to_hbm [thread:$0]  %s229, 128, %s226, %s209
        $region36: #{tpu_custom_call.1} parent=23 // pred_fallthru
          _
        // Predicated region
        $region37: #{tpu_custom_call.1} parent=23 // pred_check
          %p232 = pneg %p109
        $region38: #{tpu_custom_call.1} parent=23 // pred_check_branch
          %234 = sbr.rel (%p232) target = $region40
        $region39: #{tpu_custom_call.1} parent=23 // pred_region
          %s236 = ssub.s32 128, 128
          %237 = vsyncadd %s214, %s236
          %s238 = smul.addr %s27, 128
          %s239 = scalar_lea.hbm %s2, %s238
          %s241 = sshll.u32 %s217, 4
          %s242 = int_to_ptr.vmem [resolvable:$true] %s241
          %244 = dma.vmem_to_hbm [thread:$0]  %s242, 128, %s239, %s214
        $region40: #{tpu_custom_call.1} parent=23 // pred_fallthru
          _
      $region24: #{tpu_custom_call.1} parent=5 // pred_fallthru
        _
      %p245 = scmp.le.s32.totalorder 2, %s18
      // Predicated region
      $region41: #{tpu_custom_call.1} parent=5 // pred_check
        %p246 = pneg %p245
      $region42: #{tpu_custom_call.1} parent=5 // pred_check_branch
        %248 = sbr.rel (%p246) target = $region44
      $region43: #{tpu_custom_call.1} parent=5 // pred_region
        %s249 = ssub.s32 %s18, 2
        // Predicated region
        $region45: #{tpu_custom_call.1} parent=43 // pred_check
          %p250 = pneg %p89
        $region46: #{tpu_custom_call.1} parent=43 // pred_check_branch
          %252 = sbr.rel (%p250) target = $region48
        $region47: #{tpu_custom_call.1} parent=43 // pred_region
          %s253 = sand.u32 %s74, 1
          %s254 = scalar_lea.sflag [#allocation4], %s253
          %s255 = sand.u32 %s74, 1
          %s256 = smul.addr %s255, 8
          %s257 = scalar_lea.vmem [#allocation5], %s256
          %258 = dma.done %s254, 128
        $region48: #{tpu_custom_call.1} parent=43 // pred_fallthru
          _
        // Predicated region
        $region49: #{tpu_custom_call.1} parent=43 // pred_check
          %p259 = pneg %p115
        $region50: #{tpu_custom_call.1} parent=43 // pred_check_branch
          %261 = sbr.rel (%p259) target = $region52
        $region51: #{tpu_custom_call.1} parent=43 // pred_region
          %s262 = sand.u32 %s100, 1
          %s263 = scalar_lea.sflag [#allocation7], %s262
          %s264 = sand.u32 %s100, 1
          %s265 = smul.addr %s264, 8
          %s266 = scalar_lea.vmem [#allocation6], %s265
          %267 = dma.done %s263, 128
        $region52: #{tpu_custom_call.1} parent=43 // pred_fallthru
          _
      $region44: #{tpu_custom_call.1} parent=5 // pred_fallthru
        _
    $region6: #{tpu_custom_call.1} parent=1 // loop_footer
      %s22 = sadd.s32 1, %s18
    $region7: #{tpu_custom_call.1} parent=1 // loop_footer_branch
      %17 = sbr.rel target = $region3
    $region8: #{tpu_custom_call.1} parent=1 // loop_exit
      _
    %268 = vsyncpa [#allocation3], 1
    %s269 = scalar_lea.sflag [#allocation3], 1
    %270 = vsyncpa %s269, 1
    %271 = vsyncpa [#allocation4], 1
    %s272 = scalar_lea.sflag [#allocation4], 1
    %273 = vsyncpa %s272, 1
    %274 = vsyncpa [#allocation7], 1
    %s275 = scalar_lea.sflag [#allocation7], 1
    %276 = vsyncpa %s275, 1

</llo_original>
